<compile_context>
chip_gen: v7x
topology: tpu7x:2x2x1
jax: 0.10.0
libtpu: 0.0.40
codegen_flags: <defaults>
</compile_context>

<pallas_src>
import jax
import jax.numpy as jnp
from jax.experimental import pallas as pl
from jax.experimental.pallas import tpu as pltpu


def _round_up(x, m):
    return ((x + m - 1) // m) * m


def _patch_embed_kernel(p_ref, w_ref, pos_ref, o_ref):
    """(TILE_M, K_pad)bf16 @ (K_pad, TILE_D)bf16 -> f32 acc, + (pos+bias) f32.

    p_ref:   (TILE_M, K_pad)   flattened patches (bf16)
    w_ref:   (K_pad, TILE_D)   conv weight, reshaped/transposed/padded (bf16)
    pos_ref: (TILE_M, TILE_D)  positional embedding with conv bias folded in (f32)
    o_ref:   (TILE_M, TILE_D)  output (f32)
    """
    acc = jnp.dot(p_ref[...], w_ref[...], preferred_element_type=jnp.float32)
    o_ref[...] = (acc + pos_ref[...]).astype(o_ref.dtype)


def _choose_tile_m(B, N, target=256):
    """Pick an M-tile over flattened M = B*N such that every tile maps to a
    contiguous, block-aligned range of positional-embedding rows.

    Returns (TILE_M, rep): rep > 0 means pos is pre-tiled `rep` times in the
    wrapper (tile spans `rep` whole images); rep == 1 with TILE_M <= N means
    the tile is a divisor of N and pos is indexed with a modulo index_map.
    """
    M = B * N
    if M <= target:
        return M, B                          # everything fits in one tile
    if N >= target:
        for t in range(target, 7, -1):       # divisor of N, multiple of 8
            if N % t == 0 and t % 8 == 0:
                return t, 1
        return N, 1                          # whole-image tile fallback
    # N < target < M: tile spans r whole images (r | B, aligned)
    for r in range(max(1, target // N), 0, -1):
        if B % r == 0 and ((r * N) % 8 == 0 or r * N == M):
            return r * N, r
    return N, 1


def _choose_tile_d(D_pad, target=512):
    if D_pad <= target:
        return D_pad
    for t in range(target, 127, -128):       # multiple of 128 dividing D_pad
        if D_pad % t == 0:
            return t
    return 128


def image_vit_feature_extractor(image_raw_inputs, conv_w, conv_b, pos_embed,
                                patch_size):
    """Pallas implementation of ImageViTFeatureExtractor.forward (up to the prelude).

    image_raw_inputs: (B, C, H, W) float32, NCHW (PyTorch convention)
    conv_w:           (D, C, P, P) float32 (Conv2d weight, OIHW)
    conv_b:           (D,)         float32
    pos_embed:        (1, N, D)    float32
    returns: (patches, attention_mask) with patches (B, N, D), mask (B, N)
    """
    B, C, H, W = image_raw_inputs.shape
    P = patch_size
    assert H % P == 0 and W % P == 0, "image dims must be divisible by patch size"
    nH, nW = H // P, W // P
    N = nH * nW
    D = conv_w.shape[0]
    K = C * P * P
    assert pos_embed.shape == (1, N, D)

    M = B * N
    K_pad = _round_up(K, 128)
    D_pad = _round_up(D, 128)

    TILE_M, rep = _choose_tile_m(B, N)
    TILE_D = _choose_tile_d(D_pad)

    # --- wrapper glue (plain JAX) -------------------------------------------
    # Patch extraction done in bf16 (halves the transpose's HBM traffic).
    xb = image_raw_inputs.astype(jnp.bfloat16)
    patches = xb.reshape(B, C, nH, P, nW, P)
    patches = patches.transpose(0, 2, 4, 1, 3, 5).reshape(M, K)  # (c, ph, pw) order
    if K_pad != K:
        patches = jnp.pad(patches, ((0, 0), (0, K_pad - K)))

    w2 = conv_w.reshape(D, K).T.astype(jnp.bfloat16)             # (K, D)
    if (K_pad != K) or (D_pad != D):
        w2 = jnp.pad(w2, ((0, K_pad - K), (0, D_pad - D)))

    # Fold the conv bias into the positional embedding; keep the epilogue f32.
    posb = (pos_embed[0] + conv_b[None, :]).astype(jnp.float32)  # (N, D)
    if D_pad != D:
        posb = jnp.pad(posb, ((0, 0), (0, D_pad - D)))           # (N, D_pad)
    if rep > 1:
        posb = jnp.tile(posb, (rep, 1))                          # (rep*N, D_pad)
    num_pos_blocks = posb.shape[0] // TILE_M

    num_m = M // TILE_M
    num_d = D_pad // TILE_D

    if num_pos_blocks == 1:
        pos_index = lambda d, m: (0, d)
    else:
        pos_index = lambda d, m: (m % num_pos_blocks, d)

    # Double-buffered tiles + headroom, clamped to a sane range.
    vmem_bytes = 2 * (TILE_M * K_pad * 2 + K_pad * TILE_D * 2
                      + 2 * TILE_M * TILE_D * 4) + (4 << 20)
    vmem_bytes = int(min(max(vmem_bytes, 16 << 20), 100 << 20))

    grid_spec = pltpu.PrefetchScalarGridSpec(
        num_scalar_prefetch=0,
        # d outer: the (K_pad, TILE_D) weight tile stays resident while the
        # (usually larger) patch tiles stream along the inner m axis.
        grid=(num_d, num_m),
        in_specs=[
            pl.BlockSpec((TILE_M, K_pad), lambda d, m: (m, 0)),
            pl.BlockSpec((K_pad, TILE_D), lambda d, m: (0, d)),
            pl.BlockSpec((TILE_M, TILE_D), pos_index),
        ],
        out_specs=pl.BlockSpec((TILE_M, TILE_D), lambda d, m: (m, d)),
    )

    out = pl.pallas_call(
        _patch_embed_kernel,
        out_shape=jax.ShapeDtypeStruct((M, D_pad), jnp.float32),
        grid_spec=grid_spec,
        compiler_params=pltpu.CompilerParams(
            dimension_semantics=("parallel", "parallel"),
            vmem_limit_bytes=vmem_bytes),
    )(patches, w2, posb)

    if D_pad != D:
        out = out[:, :D]
    out = out.reshape(B, N, D)

    # Dropout(p) in eval mode == identity (no-op).
    attention_mask = jnp.ones((B, N), dtype=jnp.float32)
    # TODO(synk): SimpleBlock prelude would consume (out, attention_mask) here.
    return out, attention_mask


if __name__ == "__main__":
    # Small config consistent with the module:
    #   image_size=16, patch_size=4, in_channels=3, hidden_size=32 -> n_patches=16
    B, C, IMG, P, D = 2, 3, 16, 4, 32
    N = (IMG // P) ** 2
    K = C * P * P

    key = jax.random.PRNGKey(0)
    k_img, k_w, k_b, k_p = jax.random.split(key, 4)

    x = jax.random.normal(k_img, (B, C, IMG, IMG), dtype=jnp.float32)

    # Conv weight: xavier_uniform over (D, C, P, P) as in the module; use small
    # random bias / pos_embed so the add paths are actually exercised.
    fan_in, fan_out = C * P * P, D
    bound = (6.0 / (fan_in + fan_out)) ** 0.5
    conv_w = jax.random.uniform(k_w, (D, C, P, P), minval=-bound, maxval=bound,
                                dtype=jnp.float32)
    conv_b = 0.1 * jax.random.normal(k_b, (D,), dtype=jnp.float32)
    pos_embed = 0.02 * jax.random.normal(k_p, (1, N, D), dtype=jnp.float32)

    out, mask = image_vit_feature_extractor(x, conv_w, conv_b, pos_embed, P)
    out = jax.block_until_ready(out)

    # Reference: strided conv on the same bf16-rounded inputs (the kernel casts
    # patches/weights to bf16 before the MXU), f32 accumulate, then bias + pos.
    x32 = x.astype(jnp.bfloat16).astype(jnp.float32)
    w32 = conv_w.astype(jnp.bfloat16).astype(jnp.float32)
    ref = jax.lax.conv_general_dilated(
        x32, w32, window_strides=(P, P), padding="VALID",
        dimension_numbers=("NCHW", "OIHW", "NCHW"),
        precision=jax.lax.Precision.HIGHEST)                     # (B, D, nH, nW)
    ref = ref.reshape(B, D, N).transpose(0, 2, 1)                # (B, N, D)
    ref = ref + conv_b.reshape(1, 1, D) + pos_embed

    assert out.shape == (B, N, D)
    assert mask.shape == (B, N)
    assert jnp.allclose(out, ref, atol=1e-3, rtol=1e-3), "mismatch vs conv reference"
    print("KERNEL_OK")
</pallas_src>

<mosaic_0001>
module attributes {stable_mosaic.version = 11 : i64} {
  func.func @_patch_embed_kernel(%arg0: i32, %arg1: i32, %arg2: memref<32x128xbf16, #tpu.memory_space<vmem>>, %arg3: memref<128x128xbf16, #tpu.memory_space<vmem>>, %arg4: memref<32x128xf32, #tpu.memory_space<vmem>>, %arg5: memref<32x128xf32, #tpu.memory_space<vmem>>) attributes {dimension_semantics = [#tpu.dimension_semantics<parallel>, #tpu.dimension_semantics<parallel>], iteration_bounds = array<i64: 1, 1>, scalar_prefetch = 0 : i64, scratch_operands = 0 : i64, tpu.core_type = #tpu.core_type<tc>, window_params = [{transform_indices = @transform_0, window_bounds = array<i64: 32, 128>}, {transform_indices = @transform_1, window_bounds = array<i64: 128, 128>}, {transform_indices = @transform_2, window_bounds = array<i64: 32, 128>}, {transform_indices = @transform_3, window_bounds = array<i64: 32, 128>}]} {
    %c0 = arith.constant 0 : index
    %c0_0 = arith.constant 0 : index
    %0 = vector.load %arg2[%c0, %c0_0] : memref<32x128xbf16, #tpu.memory_space<vmem>>, vector<32x128xbf16>
    %c0_1 = arith.constant 0 : index
    %c0_2 = arith.constant 0 : index
    %1 = vector.load %arg3[%c0_1, %c0_2] : memref<128x128xbf16, #tpu.memory_space<vmem>>, vector<128x128xbf16>
    %cst = arith.constant dense<0.000000e+00> : vector<32x128xf32>
    %2 = tpu.matmul %0, %1, %cst {dimension_numbers = #tpu.dot_dimension_numbers<[1], [0], [0], [1], [0, 0, 1, 1], [], []>} : vector<32x128xbf16>, vector<128x128xbf16>, vector<32x128xf32> -> vector<32x128xf32>
    %c0_3 = arith.constant 0 : index
    %c0_4 = arith.constant 0 : index
    %3 = vector.load %arg4[%c0_3, %c0_4] : memref<32x128xf32, #tpu.memory_space<vmem>>, vector<32x128xf32>
    %4 = arith.addf %2, %3 : vector<32x128xf32>
    %c0_5 = arith.constant 0 : index
    %c0_6 = arith.constant 0 : index
    %5 = vector.load %arg5[%c0_5, %c0_6] : memref<32x128xf32, #tpu.memory_space<vmem>>, vector<32x128xf32>
    tpu.vector_store %arg5[%c0_5, %c0_6], %4 {strides = array<i32>} : memref<32x128xf32, #tpu.memory_space<vmem>>, vector<32x128xf32>,
    return
  }
  func.func @transform_0(%arg0: i32, %arg1: i32) -> (i32, i32) {
    %c0_i32 = arith.constant 0 : i32
    %c0_i32_0 = arith.constant 0 : i32
    return %arg1, %c0_i32 : i32, i32
  }
  func.func @transform_1(%arg0: i32, %arg1: i32) -> (i32, i32) {
    %c0_i32 = arith.constant 0 : i32
    %c0_i32_0 = arith.constant 0 : i32
    return %c0_i32, %arg0 : i32, i32
  }
  func.func @transform_2(%arg0: i32, %arg1: i32) -> (i32, i32) {
    %c0_i32 = arith.constant 0 : i32
    %c0_i32_0 = arith.constant 0 : i32
    return %c0_i32, %arg0 : i32, i32
  }
  func.func @transform_3(%arg0: i32, %arg1: i32) -> (i32, i32) {
    %c0_i32 = arith.constant 0 : i32
    return %arg1, %arg0 : i32, i32
  }
}

</mosaic_0001>

<llo_original>
// kernel: tpu_custom_call.1
$region0: #{tpu_custom_call.1}
  #allocation0 [shape = 'u32[]', space=smem, size = 0x4, offset = 0x4, fixed_abs, tag = 'smem constant byte address 0x4 - core index']
  #allocation1 [shape = 'u32[144,128]{1,0:T(1,128)}', space=vmem, size = 0x12000, scoped, tag = 'internal scratch']
  %s0 = inlined_call_operand.hbm [shape: bf16[32,128], index: 0, kind: input, shape index: {}]
  %s1 = inlined_call_operand.hbm [shape: bf16[128,128], index: 1, kind: input, shape index: {}]
  %s2 = inlined_call_operand.hbm [shape: f32[32,128], index: 2, kind: input, shape index: {}]
  %s3 = inlined_call_operand.hbm [shape: f32[32,128], index: 3, kind: output, shape index: {}]
  %s4 = sld [smem:[#allocation0]]
  $region34: #{tpu_custom_call.1} parent=0
    _
  %s6 = ssub.s32 1, %s4
  %s7 = scalar_select 0, %s6, %s4
  $region1: #{tpu_custom_call.1} parent=0
    #allocation2 [shape = 'u8[8192]{0}', space=vmem, size = 0x2000, scoped, tag = 'input window, operand 0, single buffered']
    #allocation3 [shape = 's32[1]{0}', space=sflag, size = 0x4, scoped, tag = 'scoped memory for tpu_custom_call.1']
    #allocation4 [shape = 's32[1]{0}', space=sflag, size = 0x4, scoped, tag = 'scoped memory for tpu_custom_call.1']
    #allocation5 [shape = 'u8[32768]{0}', space=vmem, size = 0x8000, scoped, tag = 'input window, operand 1, single buffered']
    #allocation6 [shape = 's32[1]{0}', space=sflag, size = 0x4, scoped, tag = 'scoped memory for tpu_custom_call.1']
    #allocation7 [shape = 'u8[16384]{0}', space=vmem, size = 0x4000, scoped, tag = 'input window, operand 2, single buffered']
    #allocation8 [shape = 'u8[16384]{0}', space=vmem, size = 0x4000, scoped, tag = 'output window, operand 0, single buffered']
    %8 = vsyncpa [#allocation3], 0
    %9 = vsyncpa [#allocation6], 0
    %10 = vsyncpa [#allocation4], 0
    // Predicated region
    $region2: #{tpu_custom_call.1} parent=1 // pred_check
      _
    $region3: #{tpu_custom_call.1} parent=1 // pred_check_branch
      %12 = sbr.rel (0) target = $region5
    $region4: #{tpu_custom_call.1} parent=1 // pred_region
      %s14 = ssub.s32 256, 256
      %15 = vsyncadd [#allocation3], %s14
      %s16 = sshll.u32 [#allocation2], 4
      %s17 = int_to_ptr.vmem [resolvable:$true] %s16
      %22 = dma.hbm_to_vmem [thread:$0]  %s0, 256, %s17, [#allocation3], 64, 64, 4
    $region5: #{tpu_custom_call.1} parent=1 // pred_fallthru
      _
    // Predicated region
    $region6: #{tpu_custom_call.1} parent=1 // pred_check
      _
    $region7: #{tpu_custom_call.1} parent=1 // pred_check_branch
      %24 = sbr.rel (0) target = $region9
    $region8: #{tpu_custom_call.1} parent=1 // pred_region
      %s26 = ssub.s32 1024, 1024
      %27 = vsyncadd [#allocation6], %s26
      %s28 = sshll.u32 [#allocation5], 4
      %s29 = int_to_ptr.vmem [resolvable:$true] %s28
      %34 = dma.hbm_to_vmem [thread:$0]  %s1, 1024, %s29, [#allocation6], 64, 64, 4
    $region9: #{tpu_custom_call.1} parent=1 // pred_fallthru
      _
    // Predicated region
    $region10: #{tpu_custom_call.1} parent=1 // pred_check
      _
    $region11: #{tpu_custom_call.1} parent=1 // pred_check_branch
      %36 = sbr.rel (0) target = $region13
    $region12: #{tpu_custom_call.1} parent=1 // pred_region
      %s38 = ssub.s32 512, 512
      %39 = vsyncadd [#allocation6], %s38
      %s40 = sshll.u32 [#allocation7], 4
      %s41 = int_to_ptr.vmem [resolvable:$true] %s40
      %46 = dma.hbm_to_vmem [thread:$0]  %s2, 512, %s41, [#allocation6], 128, 128, 8
    $region13: #{tpu_custom_call.1} parent=1 // pred_fallthru
      _
    // Predicated region
    $region14: #{tpu_custom_call.1} parent=1 // pred_check
      _
    $region15: #{tpu_custom_call.1} parent=1 // pred_check_branch
      %48 = sbr.rel (0) target = $region17
    $region16: #{tpu_custom_call.1} parent=1 // pred_region
      %49 = dma.done [#allocation3], 256
    $region17: #{tpu_custom_call.1} parent=1 // pred_fallthru
      _
    // Predicated region
    $region18: #{tpu_custom_call.1} parent=1 // pred_check
      _
    $region19: #{tpu_custom_call.1} parent=1 // pred_check_branch
      %51 = sbr.rel (0) target = $region21
    $region20: #{tpu_custom_call.1} parent=1 // pred_region
      %52 = dma.done [#allocation6], 1024
    $region21: #{tpu_custom_call.1} parent=1 // pred_fallthru
      _
    // Predicated region
    $region22: #{tpu_custom_call.1} parent=1 // pred_check
      _
    $region23: #{tpu_custom_call.1} parent=1 // pred_check_branch
      %54 = sbr.rel (0) target = $region25
    $region24: #{tpu_custom_call.1} parent=1 // pred_region
      %55 = dma.done [#allocation6], 512
    $region25: #{tpu_custom_call.1} parent=1 // pred_fallthru
      _
    %v57 = vld [vmem:[#allocation2] sm:$0xf]
    %v58 = vld [vmem:[#allocation2 + $0x4] sm:$0xf]
    %v59 = vld [vmem:[#allocation2 + $0x8] sm:$0xf]
    %v60 = vld [vmem:[#allocation2 + $0xc] sm:$0xf]
    %v61 = vld [vmem:[#allocation5] sm:$0xf]
    %v62 = vld [vmem:[#allocation5 + $0x4] sm:$0xf]
    %v63 = vld [vmem:[#allocation5 + $0x8] sm:$0xf]
    %v64 = vld [vmem:[#allocation5 + $0xc] sm:$0xf]
    %v65 = vld [vmem:[#allocation5 + $0x10] sm:$0xf]
    %v66 = vld [vmem:[#allocation5 + $0x14] sm:$0xf]
    %v67 = vld [vmem:[#allocation5 + $0x18] sm:$0xf]
    %v68 = vld [vmem:[#allocation5 + $0x1c] sm:$0xf]
    %v69 = vld [vmem:[#allocation5 + $0x20] sm:$0xf]
    %v70 = vld [vmem:[#allocation5 + $0x24] sm:$0xf]
    %v71 = vld [vmem:[#allocation5 + $0x28] sm:$0xf]
    %v72 = vld [vmem:[#allocation5 + $0x2c] sm:$0xf]
    %v73 = vld [vmem:[#allocation5 + $0x30] sm:$0xf]
    %v74 = vld [vmem:[#allocation5 + $0x34] sm:$0xf]
    %v75 = vld [vmem:[#allocation5 + $0x38] sm:$0xf]
    %v76 = vld [vmem:[#allocation5 + $0x3c] sm:$0xf]
    %v77 = vld [vmem:[#allocation7] sm:$0xff]
    %v78 = vld [vmem:[#allocation7 + $0x8] sm:$0xff]
    %v79 = vld [vmem:[#allocation7 + $0x10] sm:$0xff]
    %v80 = vld [vmem:[#allocation7 + $0x18] sm:$0xff]
    %v85 = vunpack.c.l.b16 %v57
    %v86 = vunpack.c.l.b16 %v58
    %v87 = vunpack.c.l.b16 %v59
    %v88 = vunpack.c.l.b16 %v60
    %v89 = vpack.c.b16 %v86, %v85
    %v90 = vpack.c.b16 %v88, %v87
    %v109 = vunpack.c.l.b16 %v61
    %v110 = vunpack.c.l.b16 %v62
    %v111 = vunpack.c.l.b16 %v63
    %v112 = vunpack.c.l.b16 %v64
    %v113 = vunpack.c.l.b16 %v65
    %v114 = vunpack.c.l.b16 %v66
    %v115 = vunpack.c.l.b16 %v67
    %v116 = vunpack.c.l.b16 %v68
    %v117 = vunpack.c.l.b16 %v69
    %v118 = vunpack.c.l.b16 %v70
    %v119 = vunpack.c.l.b16 %v71
    %v120 = vunpack.c.l.b16 %v72
    %v121 = vunpack.c.l.b16 %v73
    %v122 = vunpack.c.l.b16 %v74
    %v123 = vunpack.c.l.b16 %v75
    %v124 = vunpack.c.l.b16 %v76
    %v125 = vpack.c.b16 %v110, %v109
    %v126 = vpack.c.b16 %v112, %v111
    %v127 = vpack.c.b16 %v114, %v113
    %v128 = vpack.c.b16 %v116, %v115
    %v129 = vpack.c.b16 %v118, %v117
    %v130 = vpack.c.b16 %v120, %v119
    %v131 = vpack.c.b16 %v122, %v121
    %v132 = vpack.c.b16 %v124, %v123
    %141 = vmatprep.subr.bf16.mxu0 0
    %142 = vmatpush1.bf16.msra.mxu0 %v125
    %143 = vmatprep.subr.bf16.mxu0 0
    %144 = vmatpush1.bf16.msra.mxu0 %v126
    %145 = vmatprep.subr.bf16.mxu0 0
    %146 = vmatpush1.bf16.msra.mxu0 %v127
    %147 = vmatprep.subr.bf16.mxu0 0
    %148 = vmatpush1.bf16.msra.mxu0 %v128
    %149 = vmatprep.subr.bf16.mxu0 0
    %150 = vmatpush1.bf16.msra.mxu0 %v129
    %151 = vmatprep.subr.bf16.mxu0 0
    %152 = vmatpush1.bf16.msra.mxu0 %v130
    %153 = vmatprep.subr.bf16.mxu0 0
    %154 = vmatpush1.bf16.msra.mxu0 %v131
    %155 = vmatprep.subr.bf16.mxu0 0
    %156 = vmatpush1.bf16.msra.mxu0 %v132
    %157 = vmatprep.subr.bf16.mxu0 0
    %158 = vmatpush1.bf16.msra.mxu0 0
    %159 = vmatprep.subr.bf16.mxu0 0
    %160 = vmatpush1.bf16.msra.mxu0 0
    %161 = vmatprep.subr.bf16.mxu0 0
    %162 = vmatpush1.bf16.msra.mxu0 0
    %163 = vmatprep.subr.bf16.mxu0 0
    %164 = vmatpush1.bf16.msra.mxu0 0
    %165 = vmatprep.subr.bf16.mxu0 0
    %166 = vmatpush1.bf16.msra.mxu0 0
    %167 = vmatprep.subr.bf16.mxu0 0
    %168 = vmatpush1.bf16.msra.mxu0 0
    %169 = vmatprep.subr.bf16.mxu0 0
    %170 = vmatpush1.bf16.msra.mxu0 0
    %171 = vmatprep.subr.bf16.mxu0 0
    %172 = vmatpush1.bf16.msra.mxu0 0
    %173 = vmatprep.mubr.bf16.mxu0 0
    %174 = vmatmul.mubr.bf16.gmra.mrb[0].mxu0 %v89
    %v175 = vpop.f32.mrb[0].mxu0
    %v176 = vadd.f32 %v77, %v175
    %v177 = vpop.f32.mrb[0].mxu0
    %v178 = vpop.f32.mrb[0].mxu0
    %v179 = vadd.f32 %v78, %v178
    %v180 = vpop.f32.mrb[0].mxu0
    %181 = vmatprep.mubr.bf16.mxu0 0
    %182 = vmatmul.mubr.bf16.gmra.mrb[0].mxu0 %v90
    %v183 = vpop.f32.mrb[0].mxu0
    %v184 = vadd.f32 %v79, %v183
    %v185 = vpop.f32.mrb[0].mxu0
    %v186 = vpop.f32.mrb[0].mxu0
    %v187 = vadd.f32 %v80, %v186
    %v188 = vpop.f32.mrb[0].mxu0
    %189 = vdwg.mxu0
    %190 = vst [vmem:[#allocation8] sm:$0xff] %v176
    %191 = vst [vmem:[#allocation8 + $0x8] sm:$0xff] %v179
    %192 = vst [vmem:[#allocation8 + $0x10] sm:$0xff] %v184
    %193 = vst [vmem:[#allocation8 + $0x18] sm:$0xff] %v187
    // Predicated region
    $region26: #{tpu_custom_call.1} parent=1 // pred_check
      _
    $region27: #{tpu_custom_call.1} parent=1 // pred_check_branch
      %195 = sbr.rel (0) target = $region29
    $region28: #{tpu_custom_call.1} parent=1 // pred_region
      %s197 = ssub.s32 512, 512
      %198 = vsyncadd [#allocation4], %s197
      %s199 = sshll.u32 [#allocation8], 4
      %s200 = int_to_ptr.vmem [resolvable:$true] %s199
      %205 = dma.vmem_to_hbm [thread:$0]  %s200, 512, %s3, [#allocation4], 128, 128, 8
    $region29: #{tpu_custom_call.1} parent=1 // pred_fallthru
      _
    // Predicated region
    $region30: #{tpu_custom_call.1} parent=1 // pred_check
      _
    $region31: #{tpu_custom_call.1} parent=1 // pred_check_branch
      %207 = sbr.rel (0) target = $region33
    $region32: #{tpu_custom_call.1} parent=1 // pred_region
      %208 = dma.done [#allocation4], 512
    $region33: #{tpu_custom_call.1} parent=1 // pred_fallthru
      _
    %209 = vsyncpa [#allocation3], 1
    %210 = vsyncpa [#allocation6], 1
    %211 = vsyncpa [#allocation4], 1

</llo_original>
